<compile_context>
chip_gen: v7x
topology: tpu7x:2x2x1
jax: 0.10.0
libtpu: 0.0.40
codegen_flags: <defaults>
</compile_context>

<pallas_src>
import jax
import jax.numpy as jnp
from jax.experimental import pallas as pl
from jax.experimental.pallas import tpu as pltpu


def _round_up(n, m):
    return ((n + m - 1) // m) * m


def _sublane(dtype):
    # Sublane granularity by dtype packing: f32 -> 8, bf16 -> 16, int8/fp8 -> 32.
    return max(8, 32 // jnp.dtype(dtype).itemsize)


def _min_parallel_tiles():
    # v7x has 2 TensorCores per chip; v4/v5p megacore also split "parallel"
    # grid axes across 2 cores.  Make sure each core gets at least one tile.
    try:
        kind = jax.devices()[0].device_kind.lower()
    except Exception:
        return 1
    return 2 if any(t in kind for t in ("v7", "v4", "v5p")) else 1


def _vmem_capacity_bytes():
    try:
        return int(pltpu.get_tpu_info().vmem_capacity_bytes)
    except Exception:
        return 64 * 1024 * 1024  # conservative (v7x per-TC size)


# ----------------------------------------------------------------------------
# Kernel body
# ----------------------------------------------------------------------------
def _senet_kernel(x_ref, w1t_ref, w2t_ref, alpha_ref, o_ref):
    # x_ref:     (B_TILE, C)  compute dtype, VMEM (pipelined over the B grid)
    # w1t_ref:   (C, HID)     compute dtype, VMEM, resident (constant index map)
    # w2t_ref:   (HID, C)     compute dtype, VMEM, resident
    # alpha_ref: (1,)         f32, SMEM (PReLU slope on the scalar path)
    alpha = alpha_ref[0]

    # fc1 on the MXU, f32 accumulation.
    h = jnp.dot(x_ref[...], w1t_ref[...], preferred_element_type=jnp.float32)
    # PReLU with a single shared parameter (f32 epilogue).
    h = jnp.where(h >= 0, h, alpha * h)
    # fc2 on the MXU (feed it the weight dtype), f32 accumulation.
    y = jnp.dot(h.astype(w2t_ref.dtype), w2t_ref[...],
                preferred_element_type=jnp.float32)
    # Sigmoid gate, cast to the caller-visible dtype.
    o_ref[...] = jax.nn.sigmoid(y).astype(o_ref.dtype)


def _pallas_senet(x2d, w1t, w2t, alpha, *, b_tile, n_tiles, out_dtype,
                  vmem_limit, cost, single_buffer_weights):
    c, hid = w1t.shape
    # Constant index_map -> the weight blocks are DMA'd once and stay resident.
    # Buffered(1) drops the second (never used) pipeline buffer.
    w_kw = {"pipeline_mode": pl.Buffered(1)} if single_buffer_weights else {}
    return pl.pallas_call(
        _senet_kernel,
        out_shape=jax.ShapeDtypeStruct((n_tiles * b_tile, c), out_dtype),
        grid=(n_tiles,),
        in_specs=[
            # x: tiled over B, double-buffered HBM<->VMEM; last dim is the full
            # (unpadded) C, which is always a legal block extent.
            pl.BlockSpec((b_tile, c), lambda i: (i, 0)),
            # Weights: full-dim blocks, resident across the whole grid.
            pl.BlockSpec((c, hid), lambda i: (0, 0), **w_kw),
            pl.BlockSpec((hid, c), lambda i: (0, 0), **w_kw),
            # PReLU slope stays on the scalar path.
            pl.BlockSpec(memory_space=pltpu.MemorySpace.SMEM),
        ],
        out_specs=pl.BlockSpec((b_tile, c), lambda i: (i, 0)),
        compiler_params=pltpu.CompilerParams(
            dimension_semantics=("parallel",),   # B tiles are independent
            vmem_limit_bytes=vmem_limit,
        ),
        cost_estimate=cost,
    )(x2d, w1t, w2t, alpha)


# ----------------------------------------------------------------------------
# Wrapper API
# ----------------------------------------------------------------------------
def prepare_weights(w1, w2, prelu_alpha, *, compute_dtype=None):
    """One-time weight preparation: call once and reuse across senet_block calls.

    PyTorch nn.Linear stores weight as (out_features, in_features); the kernel
    wants plain (K, N) operands, so the transpose is paid exactly once here.
    `compute_dtype=jnp.bfloat16` is recommended on v6e/v7x (f32 accumulation and
    the sigmoid epilogue stay in f32). v7x MXU has no int8 path; use bf16/fp8.
    """
    hid, c = w1.shape
    assert w2.shape == (c, hid), "w2 must be (ch_in, ch_in // reduction)"
    w1t = jnp.asarray(w1).T            # (C, hid)
    w2t = jnp.asarray(w2).T            # (hid, C)
    if compute_dtype is not None:
        w1t = w1t.astype(compute_dtype)
        w2t = w2t.astype(compute_dtype)
    alpha = jnp.asarray(prelu_alpha, dtype=jnp.float32).reshape(1)
    return jax.block_until_ready(w1t), jax.block_until_ready(w2t), alpha


def senet_block(x, w1t, w2t, alpha, *, b_tile_max=1024):
    """SENet FC gate.  x: (B, C, 1, 1) NCHW.  Weights from prepare_weights()."""
    b, c, hh, ww = x.shape
    assert hh == 1 and ww == 1, "SENet_Block.forward requires 1x1 spatial dims"
    hid = w1t.shape[1]
    assert w1t.shape == (c, hid) and w2t.shape == (hid, c)

    out_dtype = x.dtype
    x2d = x.reshape(b, c)
    if x2d.dtype != w1t.dtype:
        x2d = x2d.astype(w1t.dtype)    # feed the MXU in the weight dtype

    in_bytes = jnp.dtype(w1t.dtype).itemsize
    out_bytes = jnp.dtype(out_dtype).itemsize
    sub = _sublane(w1t.dtype)

    # ---- VMEM-aware tile sizing (per TPU generation) -----------------------
    vmem_cap = _vmem_capacity_bytes()
    tile_budget = int(vmem_cap * 0.6)                 # leave compiler headroom
    # Worst case: both weights double-buffered (if Buffered(1) is unsupported).
    weight_bytes = 2 * 2 * c * hid * in_bytes
    per_row = 2 * c * in_bytes + 2 * c * out_bytes + 4 * (c + hid)
    avail = tile_budget - weight_bytes
    max_rows = (avail // per_row) if avail > 0 else 0
    max_rows = max(sub, (max_rows // sub) * sub)
    b_tile_cap = max(sub, min(_round_up(b_tile_max, sub), max_rows))

    # ---- grid: bound padding waste; >= 2 tiles on 2-TensorCore chips -------
    n_tiles = pl.cdiv(b, b_tile_cap)
    min_tiles = _min_parallel_tiles()
    if n_tiles < min_tiles and b >= min_tiles * sub:
        n_tiles = min_tiles
    b_tile = _round_up(pl.cdiv(b, n_tiles), sub)
    n_tiles = pl.cdiv(b, b_tile)
    b_span = n_tiles * b_tile

    if b_span != b and n_tiles == 1:
        b_tile = b                     # full-dim block is legal -> no padding
        b_span = b

    if b_span != b:
        # Rare ragged-batch case: minimal zero pad (< one tile of extra rows).
        # Padded rows just produce sigmoid(0)=0.5 and are sliced off below.
        x2d = jnp.pad(x2d, ((0, b_span - b), (0, 0)))

    cost = pl.CostEstimate(
        flops=int(4 * b * c * hid),                       # two matmuls
        transcendentals=int(b * c),                       # sigmoid
        bytes_accessed=int(b * c * (in_bytes + out_bytes) + 2 * c * hid * in_bytes),
    )
    needed = weight_bytes + b_tile * per_row
    vmem_limit = int(min(0.9 * vmem_cap, max(2 * needed + (4 << 20), 32 << 20)))

    def run(single_buffer_weights):
        return _pallas_senet(
            x2d, w1t, w2t, alpha,
            b_tile=b_tile, n_tiles=n_tiles, out_dtype=out_dtype,
            vmem_limit=vmem_limit, cost=cost,
            single_buffer_weights=single_buffer_weights)

    try:
        y = run(True)      # weights single-buffered (resident, one DMA)
    except Exception:
        y = run(False)     # fallback for jax versions without pipeline_mode

    if b_span != b:
        y = y[:b]
    return y.reshape(b, c, 1, 1)


# ----------------------------------------------------------------------------
# Self-test
# ----------------------------------------------------------------------------
if __name__ == "__main__":
    key = jax.random.PRNGKey(0)
    B, C, reduction = 2, 32, 8
    hid = C // reduction

    kx, k1, k2 = jax.random.split(key, 3)
    x = jax.random.normal(kx, (B, C, 1, 1), dtype=jnp.float32)
    # PyTorch nn.Linear layout: weight is (out_features, in_features).
    w1 = jax.random.normal(k1, (hid, C), dtype=jnp.float32) * 0.1
    w2 = jax.random.normal(k2, (C, hid), dtype=jnp.float32) * 0.1
    alpha = jnp.float32(0.25)          # nn.PReLU() default init

    # Pure-JAX reference.
    x2d = x.reshape(B, C)
    h = x2d @ w1.T
    h = jnp.where(h >= 0, h, alpha * h)
    ref = jax.nn.sigmoid(h @ w2.T).reshape(B, C, 1, 1)

    # f32 path (exact PyTorch-module semantics).
    w1t, w2t, a = prepare_weights(w1, w2, alpha)                 # one-time prep
    out = jax.block_until_ready(senet_block(x, w1t, w2t, a))
    assert out.shape == (B, C, 1, 1)
    assert jnp.allclose(out, ref, atol=1e-5, rtol=1e-5)

    # bf16-fed MXU path (recommended on v6e/v7x): same gate, looser tolerance.
    w1t_bf, w2t_bf, a_bf = prepare_weights(w1, w2, alpha,
                                           compute_dtype=jnp.bfloat16)
    out_bf = jax.block_until_ready(senet_block(x, w1t_bf, w2t_bf, a_bf))
    assert out_bf.shape == (B, C, 1, 1)
    assert jnp.allclose(out_bf.astype(jnp.float32), ref, atol=3e-2)

    print("KERNEL_OK")
</pallas_src>

<mosaic_0001>
module attributes {stable_mosaic.version = 11 : i64} {
  func.func @_senet_kernel(%arg0: i32, %arg1: memref<2x32xf32, #tpu.memory_space<vmem>>, %arg2: memref<32x4xf32, #tpu.memory_space<vmem>>, %arg3: memref<4x32xf32, #tpu.memory_space<vmem>>, %arg4: memref<1xf32, #tpu.memory_space<smem>>, %arg5: memref<2x32xf32, #tpu.memory_space<vmem>>) attributes {dimension_semantics = [#tpu.dimension_semantics<parallel>], iteration_bounds = array<i64: 1>, scalar_prefetch = 0 : i64, scratch_operands = 0 : i64, tpu.core_type = #tpu.core_type<tc>, window_params = [{transform_indices = @transform_0, window_bounds = array<i64: 2, 32>}, {pipeline_mode = #tpu.pipeline_mode<synchronous>, transform_indices = @transform_1, window_bounds = array<i64: 32, 4>}, {pipeline_mode = #tpu.pipeline_mode<synchronous>, transform_indices = @transform_2, window_bounds = array<i64: 4, 32>}, {transform_indices = @transform_3, window_bounds = array<i64: 1>}, {transform_indices = @transform_4, window_bounds = array<i64: 2, 32>}]} {
    %c0 = arith.constant 0 : index
    %0 = memref.load %arg4[%c0] : memref<1xf32, #tpu.memory_space<smem>>
    %c0_0 = arith.constant 0 : index
    %c0_1 = arith.constant 0 : index
    %1 = vector.load %arg1[%c0_0, %c0_1] : memref<2x32xf32, #tpu.memory_space<vmem>>, vector<2x32xf32>
    %c0_2 = arith.constant 0 : index
    %c0_3 = arith.constant 0 : index
    %2 = vector.load %arg2[%c0_2, %c0_3] : memref<32x4xf32, #tpu.memory_space<vmem>>, vector<32x4xf32>
    %cst = arith.constant dense<0.000000e+00> : vector<2x4xf32>
    %3 = tpu.matmul %1, %2, %cst {dimension_numbers = #tpu.dot_dimension_numbers<[1], [0], [0], [1], [0, 0, 1, 1], [], []>} : vector<2x32xf32>, vector<32x4xf32>, vector<2x4xf32> -> vector<2x4xf32>
    %cst_4 = arith.constant 0.000000e+00 : f32
    %4 = vector.broadcast %cst_4 : f32 to vector<2x4xf32>
    %5 = arith.cmpf oge, %3, %4 : vector<2x4xf32>
    %6 = vector.broadcast %0 : f32 to vector<2x4xf32>
    %7 = arith.mulf %6, %3 : vector<2x4xf32>
    %8 = arith.select %5, %3, %7 : vector<2x4xi1>, vector<2x4xf32>
    %c0_5 = arith.constant 0 : index
    %c0_6 = arith.constant 0 : index
    %9 = vector.load %arg3[%c0_5, %c0_6] : memref<4x32xf32, #tpu.memory_space<vmem>>, vector<4x32xf32>
    %cst_7 = arith.constant dense<0.000000e+00> : vector<2x32xf32>
    %10 = tpu.matmul %8, %9, %cst_7 {dimension_numbers = #tpu.dot_dimension_numbers<[1], [0], [0], [1], [0, 0, 1, 1], [], []>} : vector<2x4xf32>, vector<4x32xf32>, vector<2x32xf32> -> vector<2x32xf32>
    %11 = arith.negf %10 : vector<2x32xf32>
    %12 = math.exp %11 : vector<2x32xf32>
    %cst_8 = arith.constant 1.000000e+00 : f32
    %13 = vector.broadcast %cst_8 : f32 to vector<2x32xf32>
    %14 = arith.addf %13, %12 : vector<2x32xf32>
    %15 = arith.divf %13, %14 : vector<2x32xf32>
    %c0_9 = arith.constant 0 : index
    %c0_10 = arith.constant 0 : index
    %16 = vector.load %arg5[%c0_9, %c0_10] : memref<2x32xf32, #tpu.memory_space<vmem>>, vector<2x32xf32>
    tpu.vector_store %arg5[%c0_9, %c0_10], %15 {strides = array<i32>} : memref<2x32xf32, #tpu.memory_space<vmem>>, vector<2x32xf32>,
    return
  }
  func.func @transform_0(%arg0: i32) -> (i32, i32) {
    %c0_i32 = arith.constant 0 : i32
    %c0_i32_0 = arith.constant 0 : i32
    return %arg0, %c0_i32 : i32, i32
  }
  func.func @transform_1(%arg0: i32) -> (i32, i32) {
    %c0_i32 = arith.constant 0 : i32
    %c0_i32_0 = arith.constant 0 : i32
    %c0_i32_1 = arith.constant 0 : i32
    return %c0_i32, %c0_i32_0 : i32, i32
  }
  func.func @transform_2(%arg0: i32) -> (i32, i32) {
    %c0_i32 = arith.constant 0 : i32
    %c0_i32_0 = arith.constant 0 : i32
    %c0_i32_1 = arith.constant 0 : i32
    return %c0_i32, %c0_i32_0 : i32, i32
  }
  func.func @transform_3(%arg0: i32) -> i32 {
    %c0_i32 = arith.constant 0 : i32
    %c0_i32_0 = arith.constant 0 : i32
    return %c0_i32 : i32
  }
  func.func @transform_4(%arg0: i32) -> (i32, i32) {
    %c0_i32 = arith.constant 0 : i32
    %c0_i32_0 = arith.constant 0 : i32
    return %arg0, %c0_i32 : i32, i32
  }
}

module attributes {stable_mosaic.version = 11 : i64} {
  func.func @_senet_kernel(%arg0: i32, %arg1: memref<2x32xf32, #tpu.memory_space<vmem>>, %arg2: memref<32x4xf32, #tpu.memory_space<vmem>>, %arg3: memref<4x32xf32, #tpu.memory_space<vmem>>, %arg4: memref<1xf32, #tpu.memory_space<smem>>, %arg5: memref<2x32xf32, #tpu.memory_space<vmem>>) attributes {dimension_semantics = [#tpu.dimension_semantics<parallel>], iteration_bounds = array<i64: 1>, scalar_prefetch = 0 : i64, scratch_operands = 0 : i64, tpu.core_type = #tpu.core_type<tc>, window_params = [{transform_indices = @transform_0, window_bounds = array<i64: 2, 32>}, {pipeline_mode = #tpu.pipeline_mode<synchronous>, transform_indices = @transform_1, window_bounds = array<i64: 32, 4>}, {pipeline_mode = #tpu.pipeline_mode<synchronous>, transform_indices = @transform_2, window_bounds = array<i64: 4, 32>}, {transform_indices = @transform_3, window_bounds = array<i64: 1>}, {transform_indices = @transform_4, window_bounds = array<i64: 2, 32>}]} {
    %c0 = arith.constant 0 : index
    %0 = memref.load %arg4[%c0] : memref<1xf32, #tpu.memory_space<smem>>
    %c0_0 = arith.constant 0 : index
    %c0_1 = arith.constant 0 : index
    %1 = vector.load %arg1[%c0_0, %c0_1] : memref<2x32xf32, #tpu.memory_space<vmem>>, vector<2x32xf32>
    %c0_2 = arith.constant 0 : index
    %c0_3 = arith.constant 0 : index
    %2 = vector.load %arg2[%c0_2, %c0_3] : memref<32x4xf32, #tpu.memory_space<vmem>>, vector<32x4xf32>
    %cst = arith.constant dense<0.000000e+00> : vector<2x4xf32>
    %3 = tpu.matmul %1, %2, %cst {dimension_numbers = #tpu.dot_dimension_numbers<[1], [0], [0], [1], [0, 0, 1, 1], [], []>} : vector<2x32xf32>, vector<32x4xf32>, vector<2x4xf32> -> vector<2x4xf32>
    %cst_4 = arith.constant 0.000000e+00 : f32
    %4 = vector.broadcast %cst_4 : f32 to vector<2x4xf32>
    %5 = arith.cmpf oge, %3, %4 : vector<2x4xf32>
    %6 = vector.broadcast %0 : f32 to vector<2x4xf32>
    %7 = arith.mulf %6, %3 : vector<2x4xf32>
    %8 = arith.select %5, %3, %7 : vector<2x4xi1>, vector<2x4xf32>
    %c0_5 = arith.constant 0 : index
    %c0_6 = arith.constant 0 : index
    %9 = vector.load %arg3[%c0_5, %c0_6] : memref<4x32xf32, #tpu.memory_space<vmem>>, vector<4x32xf32>
    %cst_7 = arith.constant dense<0.000000e+00> : vector<2x32xf32>
    %10 = tpu.matmul %8, %9, %cst_7 {dimension_numbers = #tpu.dot_dimension_numbers<[1], [0], [0], [1], [0, 0, 1, 1], [], []>} : vector<2x4xf32>, vector<4x32xf32>, vector<2x32xf32> -> vector<2x32xf32>
    %11 = arith.negf %10 : vector<2x32xf32>
    %12 = math.exp %11 : vector<2x32xf32>
    %cst_8 = arith.constant 1.000000e+00 : f32
    %13 = vector.broadcast %cst_8 : f32 to vector<2x32xf32>
    %14 = arith.addf %13, %12 : vector<2x32xf32>
    %15 = arith.divf %13, %14 : vector<2x32xf32>
    %c0_9 = arith.constant 0 : index
    %c0_10 = arith.constant 0 : index
    %16 = vector.load %arg5[%c0_9, %c0_10] : memref<2x32xf32, #tpu.memory_space<vmem>>, vector<2x32xf32>
    tpu.vector_store %arg5[%c0_9, %c0_10], %15 {strides = array<i32>} : memref<2x32xf32, #tpu.memory_space<vmem>>, vector<2x32xf32>,
    return
  }
  func.func @transform_0(%arg0: i32) -> (i32, i32) {
    %c0_i32 = arith.constant 0 : i32
    %c0_i32_0 = arith.constant 0 : i32
    return %arg0, %c0_i32 : i32, i32
  }
  func.func @transform_1(%arg0: i32) -> (i32, i32) {
    %c0_i32 = arith.constant 0 : i32
    %c0_i32_0 = arith.constant 0 : i32
    %c0_i32_1 = arith.constant 0 : i32
    return %c0_i32, %c0_i32_0 : i32, i32
  }
  func.func @transform_2(%arg0: i32) -> (i32, i32) {
    %c0_i32 = arith.constant 0 : i32
    %c0_i32_0 = arith.constant 0 : i32
    %c0_i32_1 = arith.constant 0 : i32
    return %c0_i32, %c0_i32_0 : i32, i32
  }
  func.func @transform_3(%arg0: i32) -> i32 {
    %c0_i32 = arith.constant 0 : i32
    %c0_i32_0 = arith.constant 0 : i32
    return %c0_i32 : i32
  }
  func.func @transform_4(%arg0: i32) -> (i32, i32) {
    %c0_i32 = arith.constant 0 : i32
    %c0_i32_0 = arith.constant 0 : i32
    return %arg0, %c0_i32 : i32, i32
  }
}

</mosaic_0001>

<llo_original>
// kernel: tpu_custom_call.1
$region0: #{tpu_custom_call.1}
  #allocation0 [shape = 'u32[]', space=smem, size = 0x4, offset = 0x4, fixed_abs, tag = 'smem constant byte address 0x4 - core index']
  #allocation1 [shape = 'u32[144,128]{1,0:T(1,128)}', space=vmem, size = 0x12000, scoped, tag = 'internal scratch']
  #allocation2 [shape = 'f32[1]{0:T(128)S(6)}', space=smem, size = 0x200, scoped, tag = 'scoped memory for tpu_custom_call.1']
  %s0 = inlined_call_operand.vmem [shape: f32[2,32], index: 0, kind: input, shape index: {}]
  %s1 = inlined_call_operand.vmem [shape: f32[32,4], index: 1, kind: input, shape index: {}]
  %s2 = inlined_call_operand.vmem [shape: f32[4,32], index: 2, kind: input, shape index: {}]
  %s3 = inlined_call_operand.<no memory space> [shape: f32[1], index: 3, kind: input, shape index: {}]
  %s4 = inlined_call_operand.hbm [shape: f32[2,32], index: 4, kind: output, shape index: {}]
  %s5 = sld [smem:[#allocation0]]
  $region26: #{tpu_custom_call.1} parent=0
    _
  %s7 = ssub.s32 1, %s5
  %s8 = scalar_select 0, %s7, %s5
  %9 = sst [smem:[#allocation2]] %s3
  $region1: #{tpu_custom_call.1} parent=0
    #allocation3 [shape = 'u8[1024]{0}', space=vmem, size = 0x400, scoped, tag = 'output window, operand 0, single buffered']
    #allocation4 [shape = 's32[1]{0}', space=sflag, size = 0x4, scoped, tag = 'scoped memory for tpu_custom_call.1']
    %10 = vsyncpa [#allocation4], 0
    // Predicated region
    $region2: #{tpu_custom_call.1} parent=1 // pred_check
      _
    $region3: #{tpu_custom_call.1} parent=1 // pred_check_branch
      %12 = sbr.rel (0) target = $region5
    $region4: #{tpu_custom_call.1} parent=1 // pred_region
      _
    $region5: #{tpu_custom_call.1} parent=1 // pred_fallthru
      _
    // Predicated region
    $region6: #{tpu_custom_call.1} parent=1 // pred_check
      _
    $region7: #{tpu_custom_call.1} parent=1 // pred_check_branch
      %14 = sbr.rel (0) target = $region9
    $region8: #{tpu_custom_call.1} parent=1 // pred_region
      _
    $region9: #{tpu_custom_call.1} parent=1 // pred_fallthru
      _
    // Predicated region
    $region10: #{tpu_custom_call.1} parent=1 // pred_check
      _
    $region11: #{tpu_custom_call.1} parent=1 // pred_check_branch
      %16 = sbr.rel (0) target = $region13
    $region12: #{tpu_custom_call.1} parent=1 // pred_region
      _
    $region13: #{tpu_custom_call.1} parent=1 // pred_fallthru
      _
    // Predicated region
    $region14: #{tpu_custom_call.1} parent=1 // pred_check
      _
    $region15: #{tpu_custom_call.1} parent=1 // pred_check_branch
      %18 = sbr.rel (0) target = $region17
    $region16: #{tpu_custom_call.1} parent=1 // pred_region
      _
    $region17: #{tpu_custom_call.1} parent=1 // pred_fallthru
      _
    %s19 = sld [smem:[#allocation2]]
    %v20 = vld [vmem:[%s0] sm:$0x3]
    %v21 = vld [vmem:[%s1] sm:$0xff]
    %v22 = vld [vmem:[%s1 + $0x8] sm:$0xff]
    %v23 = vld [vmem:[%s1 + $0x10] sm:$0xff]
    %v24 = vld [vmem:[%s1 + $0x18] sm:$0xff]
    %vm25 = vcmask 261120
    %v27 = vsel %vm25, %v20, 0
    %29 = vmatprep.subr.mxu0 0.0
    %30 = vmatpush1.msra.mxu0 %v21
    %31 = vmatprep.subr.mxu0 0.0
    %32 = vmatpush1.msra.mxu0 %v22
    %33 = vmatprep.subr.mxu0 0.0
    %34 = vmatpush1.msra.mxu0 %v23
    %35 = vmatprep.subr.mxu0 0.0
    %36 = vmatpush1.msra.mxu0 %v24
    %37 = vmatprep.subr.mxu0 0.0
    %38 = vmatpush1.msra.mxu0 0.0
    %39 = vmatprep.subr.mxu0 0.0
    %40 = vmatpush1.msra.mxu0 0.0
    %41 = vmatprep.subr.mxu0 0.0
    %42 = vmatpush1.msra.mxu0 0.0
    %43 = vmatprep.subr.mxu0 0.0
    %44 = vmatpush1.msra.mxu0 0.0
    %45 = vmatprep.subr.mxu0 0.0
    %46 = vmatpush1.msra.mxu0 0.0
    %47 = vmatprep.subr.mxu0 0.0
    %48 = vmatpush1.msra.mxu0 0.0
    %49 = vmatprep.subr.mxu0 0.0
    %50 = vmatpush1.msra.mxu0 0.0
    %51 = vmatprep.subr.mxu0 0.0
    %52 = vmatpush1.msra.mxu0 0.0
    %53 = vmatprep.subr.mxu0 0.0
    %54 = vmatpush1.msra.mxu0 0.0
    %55 = vmatprep.subr.mxu0 0.0
    %56 = vmatpush1.msra.mxu0 0.0
    %57 = vmatprep.subr.mxu0 0.0
    %58 = vmatpush1.msra.mxu0 0.0
    %59 = vmatprep.subr.mxu0 0.0
    %60 = vmatpush1.msra.mxu0 0.0
    %61 = vmatprep.subr.mxu0 0.0
    %62 = vmatpush1.msra.mxu0 0.0
    %63 = vmatprep.subr.mxu0 0.0
    %64 = vmatpush1.msra.mxu0 0.0
    %65 = vmatprep.subr.mxu0 0.0
    %66 = vmatpush1.msra.mxu0 0.0
    %67 = vmatprep.subr.mxu0 0.0
    %68 = vmatpush1.msra.mxu0 0.0
    %69 = vmatprep.subr.mxu0 0.0
    %70 = vmatpush1.msra.mxu0 0.0
    %71 = vmatprep.subr.mxu0 0.0
    %72 = vmatpush1.msra.mxu0 0.0
    %73 = vmatprep.subr.mxu0 0.0
    %74 = vmatpush1.msra.mxu0 0.0
    %75 = vmatprep.subr.mxu0 0.0
    %76 = vmatpush1.msra.mxu0 0.0
    %77 = vmatprep.subr.mxu0 0.0
    %78 = vmatpush1.msra.mxu0 0.0
    %79 = vmatprep.subr.mxu0 0.0
    %80 = vmatpush1.msra.mxu0 0.0
    %81 = vmatprep.subr.mxu0 0.0
    %82 = vmatpush1.msra.mxu0 0.0
    %83 = vmatprep.subr.mxu0 0.0
    %84 = vmatpush1.msra.mxu0 0.0
    %85 = vmatprep.subr.mxu0 0.0
    %86 = vmatpush1.msra.mxu0 0.0
    %87 = vmatprep.subr.mxu0 0.0
    %88 = vmatpush1.msra.mxu0 0.0
    %89 = vmatprep.subr.mxu0 0.0
    %90 = vmatpush1.msra.mxu0 0.0
    %91 = vmatprep.subr.mxu0 0.0
    %92 = vmatpush1.msra.mxu0 0.0
    %93 = vmatprep.mubr.f32.mxu0 0.0
    %94 = vmatmul.mubr.f32.gmra.mrb[0].mxu0 %v27
    %v95 = vpop.f32.mrb[0].mxu0
    %v96 = vadd.f32 0.0, %v95
    %v97 = vpop.f32.mrb[0].mxu0
    %98 = vdwg.mxu0
    %vm99 = vcmp.ge.f32.partialorder %v96, 0.0
    %v100 = vstv %s19
    %v101 = vmul.f32 %v100, %v96
    %v102 = vsel %vm99, %v96, %v101
    %v103 = vld [vmem:[%s2] sm:$0xf]
    %vm104 = vcmask 31744
    %v106 = vsel %vm104, %v102, 0
    %vm108 = vcmask 1043456
    %v110 = vsel %vm108, %v103, 0
    %112 = vmatprep.subr.mxu0 0.0
    %113 = vmatpush1.msra.mxu0 %v110
    %114 = vmatprep.subr.mxu0 0.0
    %115 = vmatpush1.msra.mxu0 0.0
    %116 = vmatprep.subr.mxu0 0.0
    %117 = vmatpush1.msra.mxu0 0.0
    %118 = vmatprep.subr.mxu0 0.0
    %119 = vmatpush1.msra.mxu0 0.0
    %120 = vmatprep.subr.mxu0 0.0
    %121 = vmatpush1.msra.mxu0 0.0
    %122 = vmatprep.subr.mxu0 0.0
    %123 = vmatpush1.msra.mxu0 0.0
    %124 = vmatprep.subr.mxu0 0.0
    %125 = vmatpush1.msra.mxu0 0.0
    %126 = vmatprep.subr.mxu0 0.0
    %127 = vmatpush1.msra.mxu0 0.0
    %128 = vmatprep.subr.mxu0 0.0
    %129 = vmatpush1.msra.mxu0 0.0
    %130 = vmatprep.subr.mxu0 0.0
    %131 = vmatpush1.msra.mxu0 0.0
    %132 = vmatprep.subr.mxu0 0.0
    %133 = vmatpush1.msra.mxu0 0.0
    %134 = vmatprep.subr.mxu0 0.0
    %135 = vmatpush1.msra.mxu0 0.0
    %136 = vmatprep.subr.mxu0 0.0
    %137 = vmatpush1.msra.mxu0 0.0
    %138 = vmatprep.subr.mxu0 0.0
    %139 = vmatpush1.msra.mxu0 0.0
    %140 = vmatprep.subr.mxu0 0.0
    %141 = vmatpush1.msra.mxu0 0.0
    %142 = vmatprep.subr.mxu0 0.0
    %143 = vmatpush1.msra.mxu0 0.0
    %144 = vmatprep.subr.mxu0 0.0
    %145 = vmatpush1.msra.mxu0 0.0
    %146 = vmatprep.subr.mxu0 0.0
    %147 = vmatpush1.msra.mxu0 0.0
    %148 = vmatprep.subr.mxu0 0.0
    %149 = vmatpush1.msra.mxu0 0.0
    %150 = vmatprep.subr.mxu0 0.0
    %151 = vmatpush1.msra.mxu0 0.0
    %152 = vmatprep.subr.mxu0 0.0
    %153 = vmatpush1.msra.mxu0 0.0
    %154 = vmatprep.subr.mxu0 0.0
    %155 = vmatpush1.msra.mxu0 0.0
    %156 = vmatprep.subr.mxu0 0.0
    %157 = vmatpush1.msra.mxu0 0.0
    %158 = vmatprep.subr.mxu0 0.0
    %159 = vmatpush1.msra.mxu0 0.0
    %160 = vmatprep.subr.mxu0 0.0
    %161 = vmatpush1.msra.mxu0 0.0
    %162 = vmatprep.subr.mxu0 0.0
    %163 = vmatpush1.msra.mxu0 0.0
    %164 = vmatprep.subr.mxu0 0.0
    %165 = vmatpush1.msra.mxu0 0.0
    %166 = vmatprep.subr.mxu0 0.0
    %167 = vmatpush1.msra.mxu0 0.0
    %168 = vmatprep.subr.mxu0 0.0
    %169 = vmatpush1.msra.mxu0 0.0
    %170 = vmatprep.subr.mxu0 0.0
    %171 = vmatpush1.msra.mxu0 0.0
    %172 = vmatprep.subr.mxu0 0.0
    %173 = vmatpush1.msra.mxu0 0.0
    %174 = vmatprep.subr.mxu0 0.0
    %175 = vmatpush1.msra.mxu0 0.0
    %176 = vmatprep.mubr.f32.mxu0 0.0
    %177 = vmatmul.mubr.f32.gmra.mrb[0].mxu0 %v106
    %v178 = vpop.f32.mrb[0].mxu0
    %v179 = vadd.f32 0.0, %v178
    %v180 = vpop.f32.mrb[0].mxu0
    %181 = vdwg.mxu0
    %v182 = vxor.u32 %v179, 2147483648
    %v183 = vmul.f32 %v182, 1.442695
    %v184 = vpow.pop %v183
    %v185 = vadd.f32 %v184, 1.0
    %v186 = vrcp.pop %v185
    %v187 = vmul.f32 1.0, %v186
    %vm188 = vcmask 254976
    %189 = vst.msk [vmem:[#allocation3] sm:$0x3] %vm188, %v187
    // Predicated region
    $region18: #{tpu_custom_call.1} parent=1 // pred_check
      _
    $region19: #{tpu_custom_call.1} parent=1 // pred_check_branch
      %191 = sbr.rel (0) target = $region21
    $region20: #{tpu_custom_call.1} parent=1 // pred_region
      %s193 = ssub.s32 32, 32
      %194 = vsyncadd [#allocation4], %s193
      %s196 = sshll.u32 [#allocation3], 4
      %s197 = int_to_ptr.vmem [resolvable:$true] %s196
      %199 = dma.vmem_to_hbm [thread:$0]  %s197, 32, %s4, [#allocation4]
    $region21: #{tpu_custom_call.1} parent=1 // pred_fallthru
      _
    // Predicated region
    $region22: #{tpu_custom_call.1} parent=1 // pred_check
      _
    $region23: #{tpu_custom_call.1} parent=1 // pred_check_branch
      %201 = sbr.rel (0) target = $region25
    $region24: #{tpu_custom_call.1} parent=1 // pred_region
      %202 = dma.done [#allocation4], 32
    $region25: #{tpu_custom_call.1} parent=1 // pred_fallthru
      _
    %203 = vsyncpa [#allocation4], 1

// kernel: tpu_custom_call.1
$region0: #{tpu_custom_call.1}
  #allocation0 [shape = 'u32[]', space=smem, size = 0x4, offset = 0x4, fixed_abs, tag = 'smem constant byte address 0x4 - core index']
  #allocation1 [shape = 'u32[144,128]{1,0:T(1,128)}', space=vmem, size = 0x12000, scoped, tag = 'internal scratch']
  #allocation2 [shape = 'f32[1]{0:T(128)S(6)}', space=smem, size = 0x200, scoped, tag = 'scoped memory for tpu_custom_call.1']
  %s0 = inlined_call_operand.vmem [shape: f32[2,32], index: 0, kind: input, shape index: {}]
  %s1 = inlined_call_operand.vmem [shape: f32[32,4], index: 1, kind: input, shape index: {}]
  %s2 = inlined_call_operand.vmem [shape: f32[4,32], index: 2, kind: input, shape index: {}]
  %s3 = inlined_call_operand.<no memory space> [shape: f32[1], index: 3, kind: input, shape index: {}]
  %s4 = inlined_call_operand.hbm [shape: f32[2,32], index: 4, kind: output, shape index: {}]
  %s5 = sld [smem:[#allocation0]]
  $region26: #{tpu_custom_call.1} parent=0
    _
  %s7 = ssub.s32 1, %s5
  %s8 = scalar_select 0, %s7, %s5
  %9 = sst [smem:[#allocation2]] %s3
  $region1: #{tpu_custom_call.1} parent=0
    #allocation3 [shape = 'u8[1024]{0}', space=vmem, size = 0x400, scoped, tag = 'output window, operand 0, single buffered']
    #allocation4 [shape = 's32[1]{0}', space=sflag, size = 0x4, scoped, tag = 'scoped memory for tpu_custom_call.1']
    %10 = vsyncpa [#allocation4], 0
    // Predicated region
    $region2: #{tpu_custom_call.1} parent=1 // pred_check
      _
    $region3: #{tpu_custom_call.1} parent=1 // pred_check_branch
      %12 = sbr.rel (0) target = $region5
    $region4: #{tpu_custom_call.1} parent=1 // pred_region
      _
    $region5: #{tpu_custom_call.1} parent=1 // pred_fallthru
      _
    // Predicated region
    $region6: #{tpu_custom_call.1} parent=1 // pred_check
      _
    $region7: #{tpu_custom_call.1} parent=1 // pred_check_branch
      %14 = sbr.rel (0) target = $region9
    $region8: #{tpu_custom_call.1} parent=1 // pred_region
      _
    $region9: #{tpu_custom_call.1} parent=1 // pred_fallthru
      _
    // Predicated region
    $region10: #{tpu_custom_call.1} parent=1 // pred_check
      _
    $region11: #{tpu_custom_call.1} parent=1 // pred_check_branch
      %16 = sbr.rel (0) target = $region13
    $region12: #{tpu_custom_call.1} parent=1 // pred_region
      _
    $region13: #{tpu_custom_call.1} parent=1 // pred_fallthru
      _
    // Predicated region
    $region14: #{tpu_custom_call.1} parent=1 // pred_check
      _
    $region15: #{tpu_custom_call.1} parent=1 // pred_check_branch
      %18 = sbr.rel (0) target = $region17
    $region16: #{tpu_custom_call.1} parent=1 // pred_region
      _
    $region17: #{tpu_custom_call.1} parent=1 // pred_fallthru
      _
    %s19 = sld [smem:[#allocation2]]
    %v20 = vld [vmem:[%s0] sm:$0x3]
    %v21 = vld [vmem:[%s1] sm:$0xff]
    %v22 = vld [vmem:[%s1 + $0x8] sm:$0xff]
    %v23 = vld [vmem:[%s1 + $0x10] sm:$0xff]
    %v24 = vld [vmem:[%s1 + $0x18] sm:$0xff]
    %vm25 = vcmask 261120
    %v27 = vsel %vm25, %v20, 0
    %29 = vmatprep.subr.mxu0 0.0
    %30 = vmatpush1.msra.mxu0 %v21
    %31 = vmatprep.subr.mxu0 0.0
    %32 = vmatpush1.msra.mxu0 %v22
    %33 = vmatprep.subr.mxu0 0.0
    %34 = vmatpush1.msra.mxu0 %v23
    %35 = vmatprep.subr.mxu0 0.0
    %36 = vmatpush1.msra.mxu0 %v24
    %37 = vmatprep.subr.mxu0 0.0
    %38 = vmatpush1.msra.mxu0 0.0
    %39 = vmatprep.subr.mxu0 0.0
    %40 = vmatpush1.msra.mxu0 0.0
    %41 = vmatprep.subr.mxu0 0.0
    %42 = vmatpush1.msra.mxu0 0.0
    %43 = vmatprep.subr.mxu0 0.0
    %44 = vmatpush1.msra.mxu0 0.0
    %45 = vmatprep.subr.mxu0 0.0
    %46 = vmatpush1.msra.mxu0 0.0
    %47 = vmatprep.subr.mxu0 0.0
    %48 = vmatpush1.msra.mxu0 0.0
    %49 = vmatprep.subr.mxu0 0.0
    %50 = vmatpush1.msra.mxu0 0.0
    %51 = vmatprep.subr.mxu0 0.0
    %52 = vmatpush1.msra.mxu0 0.0
    %53 = vmatprep.subr.mxu0 0.0
    %54 = vmatpush1.msra.mxu0 0.0
    %55 = vmatprep.subr.mxu0 0.0
    %56 = vmatpush1.msra.mxu0 0.0
    %57 = vmatprep.subr.mxu0 0.0
    %58 = vmatpush1.msra.mxu0 0.0
    %59 = vmatprep.subr.mxu0 0.0
    %60 = vmatpush1.msra.mxu0 0.0
    %61 = vmatprep.subr.mxu0 0.0
    %62 = vmatpush1.msra.mxu0 0.0
    %63 = vmatprep.subr.mxu0 0.0
    %64 = vmatpush1.msra.mxu0 0.0
    %65 = vmatprep.subr.mxu0 0.0
    %66 = vmatpush1.msra.mxu0 0.0
    %67 = vmatprep.subr.mxu0 0.0
    %68 = vmatpush1.msra.mxu0 0.0
    %69 = vmatprep.subr.mxu0 0.0
    %70 = vmatpush1.msra.mxu0 0.0
    %71 = vmatprep.subr.mxu0 0.0
    %72 = vmatpush1.msra.mxu0 0.0
    %73 = vmatprep.subr.mxu0 0.0
    %74 = vmatpush1.msra.mxu0 0.0
    %75 = vmatprep.subr.mxu0 0.0
    %76 = vmatpush1.msra.mxu0 0.0
    %77 = vmatprep.subr.mxu0 0.0
    %78 = vmatpush1.msra.mxu0 0.0
    %79 = vmatprep.subr.mxu0 0.0
    %80 = vmatpush1.msra.mxu0 0.0
    %81 = vmatprep.subr.mxu0 0.0
    %82 = vmatpush1.msra.mxu0 0.0
    %83 = vmatprep.subr.mxu0 0.0
    %84 = vmatpush1.msra.mxu0 0.0
    %85 = vmatprep.subr.mxu0 0.0
    %86 = vmatpush1.msra.mxu0 0.0
    %87 = vmatprep.subr.mxu0 0.0
    %88 = vmatpush1.msra.mxu0 0.0
    %89 = vmatprep.subr.mxu0 0.0
    %90 = vmatpush1.msra.mxu0 0.0
    %91 = vmatprep.subr.mxu0 0.0
    %92 = vmatpush1.msra.mxu0 0.0
    %93 = vmatprep.mubr.f32.mxu0 0.0
    %94 = vmatmul.mubr.f32.gmra.mrb[0].mxu0 %v27
    %v95 = vpop.f32.mrb[0].mxu0
    %v96 = vadd.f32 0.0, %v95
    %v97 = vpop.f32.mrb[0].mxu0
    %98 = vdwg.mxu0
    %vm99 = vcmp.ge.f32.partialorder %v96, 0.0
    %v100 = vstv %s19
    %v101 = vmul.f32 %v100, %v96
    %v102 = vsel %vm99, %v96, %v101
    %v103 = vld [vmem:[%s2] sm:$0xf]
    %vm104 = vcmask 31744
    %v106 = vsel %vm104, %v102, 0
    %vm108 = vcmask 1043456
    %v110 = vsel %vm108, %v103, 0
    %112 = vmatprep.subr.mxu0 0.0
    %113 = vmatpush1.msra.mxu0 %v110
    %114 = vmatprep.subr.mxu0 0.0
    %115 = vmatpush1.msra.mxu0 0.0
    %116 = vmatprep.subr.mxu0 0.0
    %117 = vmatpush1.msra.mxu0 0.0
    %118 = vmatprep.subr.mxu0 0.0
    %119 = vmatpush1.msra.mxu0 0.0
    %120 = vmatprep.subr.mxu0 0.0
    %121 = vmatpush1.msra.mxu0 0.0
    %122 = vmatprep.subr.mxu0 0.0
    %123 = vmatpush1.msra.mxu0 0.0
    %124 = vmatprep.subr.mxu0 0.0
    %125 = vmatpush1.msra.mxu0 0.0
    %126 = vmatprep.subr.mxu0 0.0
    %127 = vmatpush1.msra.mxu0 0.0
    %128 = vmatprep.subr.mxu0 0.0
    %129 = vmatpush1.msra.mxu0 0.0
    %130 = vmatprep.subr.mxu0 0.0
    %131 = vmatpush1.msra.mxu0 0.0
    %132 = vmatprep.subr.mxu0 0.0
    %133 = vmatpush1.msra.mxu0 0.0
    %134 = vmatprep.subr.mxu0 0.0
    %135 = vmatpush1.msra.mxu0 0.0
    %136 = vmatprep.subr.mxu0 0.0
    %137 = vmatpush1.msra.mxu0 0.0
    %138 = vmatprep.subr.mxu0 0.0
    %139 = vmatpush1.msra.mxu0 0.0
    %140 = vmatprep.subr.mxu0 0.0
    %141 = vmatpush1.msra.mxu0 0.0
    %142 = vmatprep.subr.mxu0 0.0
    %143 = vmatpush1.msra.mxu0 0.0
    %144 = vmatprep.subr.mxu0 0.0
    %145 = vmatpush1.msra.mxu0 0.0
    %146 = vmatprep.subr.mxu0 0.0
    %147 = vmatpush1.msra.mxu0 0.0
    %148 = vmatprep.subr.mxu0 0.0
    %149 = vmatpush1.msra.mxu0 0.0
    %150 = vmatprep.subr.mxu0 0.0
    %151 = vmatpush1.msra.mxu0 0.0
    %152 = vmatprep.subr.mxu0 0.0
    %153 = vmatpush1.msra.mxu0 0.0
    %154 = vmatprep.subr.mxu0 0.0
    %155 = vmatpush1.msra.mxu0 0.0
    %156 = vmatprep.subr.mxu0 0.0
    %157 = vmatpush1.msra.mxu0 0.0
    %158 = vmatprep.subr.mxu0 0.0
    %159 = vmatpush1.msra.mxu0 0.0
    %160 = vmatprep.subr.mxu0 0.0
    %161 = vmatpush1.msra.mxu0 0.0
    %162 = vmatprep.subr.mxu0 0.0
    %163 = vmatpush1.msra.mxu0 0.0
    %164 = vmatprep.subr.mxu0 0.0
    %165 = vmatpush1.msra.mxu0 0.0
    %166 = vmatprep.subr.mxu0 0.0
    %167 = vmatpush1.msra.mxu0 0.0
    %168 = vmatprep.subr.mxu0 0.0
    %169 = vmatpush1.msra.mxu0 0.0
    %170 = vmatprep.subr.mxu0 0.0
    %171 = vmatpush1.msra.mxu0 0.0
    %172 = vmatprep.subr.mxu0 0.0
    %173 = vmatpush1.msra.mxu0 0.0
    %174 = vmatprep.subr.mxu0 0.0
    %175 = vmatpush1.msra.mxu0 0.0
    %176 = vmatprep.mubr.f32.mxu0 0.0
    %177 = vmatmul.mubr.f32.gmra.mrb[0].mxu0 %v106
    %v178 = vpop.f32.mrb[0].mxu0
    %v179 = vadd.f32 0.0, %v178
    %v180 = vpop.f32.mrb[0].mxu0
    %181 = vdwg.mxu0
    %v182 = vxor.u32 %v179, 2147483648
    %v183 = vmul.f32 %v182, 1.442695
    %v184 = vpow.pop %v183
    %v185 = vadd.f32 %v184, 1.0
    %v186 = vrcp.pop %v185
    %v187 = vmul.f32 1.0, %v186
    %vm188 = vcmask 254976
    %189 = vst.msk [vmem:[#allocation3] sm:$0x3] %vm188, %v187
    // Predicated region
    $region18: #{tpu_custom_call.1} parent=1 // pred_check
      _
    $region19: #{tpu_custom_call.1} parent=1 // pred_check_branch
      %191 = sbr.rel (0) target = $region21
    $region20: #{tpu_custom_call.1} parent=1 // pred_region
      %s193 = ssub.s32 32, 32
      %194 = vsyncadd [#allocation4], %s193
      %s196 = sshll.u32 [#allocation3], 4
      %s197 = int_to_ptr.vmem [resolvable:$true] %s196
      %199 = dma.vmem_to_hbm [thread:$0]  %s197, 32, %s4, [#allocation4]
    $region21: #{tpu_custom_call.1} parent=1 // pred_fallthru
      _
    // Predicated region
    $region22: #{tpu_custom_call.1} parent=1 // pred_check
      _
    $region23: #{tpu_custom_call.1} parent=1 // pred_check_branch
      %201 = sbr.rel (0) target = $region25
    $region24: #{tpu_custom_call.1} parent=1 // pred_region
      %202 = dma.done [#allocation4], 32
    $region25: #{tpu_custom_call.1} parent=1 // pred_fallthru
      _
    %203 = vsyncpa [#allocation4], 1

</llo_original>
